<compile_context>
chip_gen: v7x
topology: tpu7x:2x2x1
jax: 0.10.0
libtpu: 0.0.40
codegen_flags: <defaults>
</compile_context>

<pallas_src>
import jax
import jax.numpy as jnp
from jax.experimental import pallas as pl
from jax.experimental.pallas import tpu as pltpu


_VMEM_LIMIT = 48 * 1024 * 1024  # < 64 MiB physical VMEM on v7x, > v5e default


# ---------------------------------------------------------------------------
# Kernel A: per-layer input projection  xproj = x @ W_ih^T + (b_ih + b_hh)
# ---------------------------------------------------------------------------
def _proj_kernel(x_ref, w_ref, b_ref, o_ref):
    o_ref[...] = (
        jnp.dot(x_ref[...], w_ref[...], preferred_element_type=jnp.float32)
        + b_ref[...]
    )


def _input_projection(x2d, w, b, *, tm=256):
    """x2d: (M, E) bf16, w: (E, G) bf16, b: (1, G) f32  ->  (M, G) f32."""
    M, E = x2d.shape
    G = w.shape[1]
    if M <= tm:
        tm = M
        m_pad = M
    else:
        m_pad = pl.cdiv(M, tm) * tm
    if m_pad != M:
        x2d = jnp.pad(x2d, ((0, m_pad - M), (0, 0)))

    out = pl.pallas_call(
        _proj_kernel,
        out_shape=jax.ShapeDtypeStruct((m_pad, G), jnp.float32),
        grid=(m_pad // tm,),
        in_specs=[
            pl.BlockSpec((tm, E), lambda i: (i, 0)),
            pl.BlockSpec(memory_space=pltpu.MemorySpace.VMEM),  # W resident, 1 copy
            pl.BlockSpec(memory_space=pltpu.MemorySpace.VMEM),  # bias resident
        ],
        out_specs=pl.BlockSpec((tm, G), lambda i: (i, 0)),
        compiler_params=pltpu.CompilerParams(
            dimension_semantics=("parallel",),
            vmem_limit_bytes=_VMEM_LIMIT,
        ),
    )(x2d, w, b)
    return out[:M]


# ---------------------------------------------------------------------------
# Kernel B: length-masked LSTM recurrence over chunks of TT timesteps.
# Grid = (batch tiles ["parallel"], time chunks ["arbitrary"]).
# ---------------------------------------------------------------------------
def _make_recurrence_kernel(hidden_dim: int, tt: int, is_last: bool):
    H = hidden_dim

    def kernel(*refs):
        if is_last:
            (lens_ref, xp_ref, w_hh_ref, w_lin_ref, b_lin_ref,
             out_ref, h_sc, c_sc) = refs
        else:
            (lens_ref, xp_ref, w_hh_ref, y_ref, h_sc, c_sc) = refs

        tc = pl.program_id(1)

        @pl.when(tc == 0)
        def _init():
            h_sc[...] = jnp.zeros_like(h_sc)
            c_sc[...] = jnp.zeros_like(c_sc)

        lens = lens_ref[...]                      # (bt, 1) int32
        w_hh = w_hh_ref[...]                      # (H, 4H) bf16, loaded once
        t0 = tc * tt

        # Static unroll over the TT timesteps of this chunk.
        for i in range(tt):
            t = t0 + i
            h_prev = h_sc[...]                    # (bt, H) f32
            c_prev = c_sc[...]
            gates = xp_ref[i] + jnp.dot(
                h_prev.astype(w_hh.dtype), w_hh,
                preferred_element_type=jnp.float32)            # (bt, 4H)

            i_g = jax.nn.sigmoid(gates[:, 0 * H:1 * H])
            f_g = jax.nn.sigmoid(gates[:, 1 * H:2 * H])
            g_g = jnp.tanh(gates[:, 2 * H:3 * H])
            o_g = jax.nn.sigmoid(gates[:, 3 * H:4 * H])

            c_new = f_g * c_prev + i_g * g_g
            h_new = o_g * jnp.tanh(c_new)

            # pack_padded_sequence semantics: freeze state once t >= length[b]
            mask = jnp.broadcast_to(lens > t, h_new.shape)     # one broadcast
            h_cur = jnp.where(mask, h_new, h_prev)
            h_sc[...] = h_cur
            c_sc[...] = jnp.where(mask, c_new, c_prev)
            if not is_last:
                y_ref[i] = h_cur.astype(y_ref.dtype)

        if is_last:
            @pl.when(tc == pl.num_programs(1) - 1)
            def _final():
                out_ref[...] = (
                    jnp.dot(h_sc[...].astype(w_lin_ref.dtype), w_lin_ref[...],
                            preferred_element_type=jnp.float32)
                    + b_lin_ref[...])

    return kernel


def _lstm_layer(xp, lens, w_hh, *, tt, bt, head=None):
    """Run one LSTM layer's recurrence.

    xp:   (T_pad, B, 4H) f32 precomputed input projections (bias folded in)
    lens: (B, 1) int32 sequence lengths
    w_hh: (H, 4H) bf16 recurrent weight (already transposed)
    head: None -> returns per-timestep hidden states (T_pad, B, H) bf16;
          (w_lin, b_lin) -> returns logits (B, C) f32 from the final hidden.
    """
    T_pad, B, G = xp.shape
    H = G // 4
    grid = (B // bt, T_pad // tt)

    in_specs = [
        pl.BlockSpec((bt, 1), lambda b, t: (b, 0)),
        pl.BlockSpec((tt, bt, G), lambda b, t: (t, b, 0)),
        pl.BlockSpec(memory_space=pltpu.MemorySpace.VMEM),     # w_hh resident
    ]
    args = [lens, xp, w_hh]
    scratch = [pltpu.VMEM((bt, H), jnp.float32),               # hidden state
               pltpu.VMEM((bt, H), jnp.float32)]               # cell state

    if head is None:
        kernel = _make_recurrence_kernel(H, tt, is_last=False)
        out_shape = jax.ShapeDtypeStruct((T_pad, B, H), jnp.bfloat16)
        out_specs = pl.BlockSpec((tt, bt, H), lambda b, t: (t, b, 0))
    else:
        w_lin, b_lin = head
        kernel = _make_recurrence_kernel(H, tt, is_last=True)
        in_specs += [pl.BlockSpec(memory_space=pltpu.MemorySpace.VMEM),
                     pl.BlockSpec(memory_space=pltpu.MemorySpace.VMEM)]
        args += [w_lin, b_lin]
        C = w_lin.shape[1]
        out_shape = jax.ShapeDtypeStruct((B, C), jnp.float32)
        out_specs = pl.BlockSpec((bt, C), lambda b, t: (b, 0))

    return pl.pallas_call(
        kernel,
        out_shape=out_shape,
        grid=grid,
        in_specs=in_specs,
        out_specs=out_specs,
        scratch_shapes=scratch,
        compiler_params=pltpu.CompilerParams(
            dimension_semantics=("parallel", "arbitrary"),
            vmem_limit_bytes=_VMEM_LIMIT,
        ),
    )(*args)


# ---------------------------------------------------------------------------
# Forward pass wrapper (embedding gather + dropout(identity) glue in JAX)
# ---------------------------------------------------------------------------
def lstm_model_forward(lyrics, total_len, params, *, tt=16):
    """lyrics: (B, T) int32, total_len: (B,) int32 -> (B, n_classes) f32."""
    emb = params["embedding"]                    # (V, E) f32
    layers = params["layers"]                    # [(w_ih^T bf16, w_hh^T bf16, b f32)]
    w_lin, b_lin = params["linear"]              # (H, C) bf16, (1, C) f32

    num_layers = len(layers)
    H = layers[0][1].shape[0]
    B, T = lyrics.shape

    # Embedding gather straight into (T, B, E): no HBM transpose of activations.
    x = emb[lyrics.T].astype(jnp.bfloat16)       # (T, B, E)
    # TODO(synk): nn.Dropout(0.2) is identity in eval mode; not applied here.

    tt = max(1, min(tt, T))
    T_pad = pl.cdiv(T, tt) * tt
    if T_pad != T:
        x = jnp.pad(x, ((0, T_pad - T), (0, 0), (0, 0)))

    # Split the batch across two tiles (-> two TensorCores on v7x) when legal.
    bt = B // 2 if (B % 16 == 0) else B

    lens = total_len.reshape(B, 1).astype(jnp.int32)

    inp = x                                      # (T_pad, B, E_l) bf16
    out = None
    for l, (w_ih, w_hh, b) in enumerate(layers):
        E_l = w_ih.shape[0]
        xp = _input_projection(inp.reshape(T_pad * B, E_l), w_ih, b)
        xp = xp.reshape(T_pad, B, 4 * H)
        if l == num_layers - 1:
            out = _lstm_layer(xp, lens, w_hh, tt=tt, bt=bt,
                              head=(w_lin, b_lin))
        else:
            inp = _lstm_layer(xp, lens, w_hh, tt=tt, bt=bt)   # (T_pad, B, H) bf16
    return out


# ---------------------------------------------------------------------------
# Pure-JAX reference (mirrors the kernel's bf16-weight / f32-accum math and
# PyTorch packed-sequence LSTM semantics) for verification.
# ---------------------------------------------------------------------------
def lstm_model_reference(lyrics, total_len, params):
    emb = params["embedding"]
    layers = params["layers"]
    w_lin, b_lin = params["linear"]
    H = layers[0][1].shape[0]

    x = emb[lyrics.T].astype(jnp.bfloat16)       # (T, B, E)
    T, B, _ = x.shape
    lens = total_len.astype(jnp.int32)

    def run_layer(seq, w_ih, w_hh, b):
        xp = jnp.dot(seq, w_ih, preferred_element_type=jnp.float32) + b  # (T,B,4H)

        def step(carry, inputs):
            h, c = carry
            xp_t, t = inputs
            gates = xp_t + jnp.dot(h.astype(jnp.bfloat16), w_hh,
                                   preferred_element_type=jnp.float32)
            i_g = jax.nn.sigmoid(gates[:, 0 * H:1 * H])
            f_g = jax.nn.sigmoid(gates[:, 1 * H:2 * H])
            g_g = jnp.tanh(gates[:, 2 * H:3 * H])
            o_g = jax.nn.sigmoid(gates[:, 3 * H:4 * H])
            c_new = f_g * c + i_g * g_g
            h_new = o_g * jnp.tanh(c_new)
            mask = (lens > t)[:, None]
            h = jnp.where(mask, h_new, h)
            c = jnp.where(mask, c_new, c)
            return (h, c), h.astype(jnp.bfloat16)

        h0 = jnp.zeros((B, H), jnp.float32)
        c0 = jnp.zeros((B, H), jnp.float32)
        (h, _), ys = jax.lax.scan(step, (h0, c0), (xp, jnp.arange(T)))
        return ys, h

    seq = x
    h_last = None
    for (w_ih, w_hh, b) in layers:
        seq, h_last = run_layer(seq, w_ih, w_hh, b)
    return (jnp.dot(h_last.astype(jnp.bfloat16), w_lin,
                    preferred_element_type=jnp.float32) + b_lin)


# ---------------------------------------------------------------------------
# Deterministic parameter construction (shapes per nn.Module __init__)
# ---------------------------------------------------------------------------
def make_params(key, vocab_size, embedding_dim, hidden_dim, num_layers, n_classes):
    keys = jax.random.split(key, 3 + 4 * num_layers)
    it = iter(keys)

    embedding = jax.random.normal(next(it), (vocab_size, embedding_dim),
                                  jnp.float32) * 0.1
    embedding = embedding.at[0].set(0.0)          # padding_idx=0

    layers = []
    for l in range(num_layers):
        in_dim = embedding_dim if l == 0 else hidden_dim
        w_ih = jax.random.normal(next(it), (4 * hidden_dim, in_dim), jnp.float32) * 0.1
        w_hh = jax.random.normal(next(it), (4 * hidden_dim, hidden_dim), jnp.float32) * 0.1
        b_ih = jax.random.normal(next(it), (4 * hidden_dim,), jnp.float32) * 0.1
        b_hh = jax.random.normal(next(it), (4 * hidden_dim,), jnp.float32) * 0.1
        layers.append((
            w_ih.T.astype(jnp.bfloat16),            # (E_l, 4H) bf16
            w_hh.T.astype(jnp.bfloat16),            # (H,   4H) bf16
            (b_ih + b_hh).reshape(1, -1),           # (1,   4H) f32 (folded biases)
        ))

    w_lin = jax.random.normal(next(it), (n_classes, hidden_dim), jnp.float32) * 0.1
    b_lin = jax.random.normal(next(it), (n_classes,), jnp.float32) * 0.1
    return {
        "embedding": embedding,
        "layers": layers,
        "linear": (w_lin.T.astype(jnp.bfloat16), b_lin.reshape(1, -1)),
    }


def _run_case(key, *, B, T, vocab_size, embedding_dim, hidden_dim,
              num_layers, n_classes, tt):
    k_par, k_tok, k_len = jax.random.split(key, 3)
    params = make_params(k_par, vocab_size, embedding_dim, hidden_dim,
                         num_layers, n_classes)

    lyrics = jax.random.randint(k_tok, (B, T), 1, vocab_size, dtype=jnp.int32)
    total_len = jax.random.randint(k_len, (B,), 1, T + 1, dtype=jnp.int32)
    total_len = total_len.at[0].set(T)            # keep one full-length sequence
    pos = jnp.arange(T)[None, :]
    lyrics = jnp.where(pos < total_len[:, None], lyrics, 0)   # padded batch

    out = jax.block_until_ready(
        lstm_model_forward(lyrics, total_len, params, tt=tt))
    ref = jax.block_until_ready(
        lstm_model_reference(lyrics, total_len, params))

    assert out.shape == (B, n_classes), out.shape
    assert jnp.allclose(out, ref, atol=5e-3, rtol=5e-3), (out, ref)
    return out


if __name__ == "__main__":
    key = jax.random.PRNGKey(0)
    k1, k2 = jax.random.split(key)

    # Small case: B=2, variable lengths, T not a multiple of the time chunk
    # (exercises T padding + multi-chunk state carry in VMEM scratch).
    _run_case(k1, B=2, T=10, vocab_size=16, embedding_dim=32, hidden_dim=32,
              num_layers=2, n_classes=3, tt=4)

    # Slightly larger case: exercises batch tiling (two "parallel" batch tiles
    # for v7x megacore) and multiple time chunks.
    _run_case(k2, B=16, T=12, vocab_size=32, embedding_dim=32, hidden_dim=32,
              num_layers=2, n_classes=3, tt=4)

    print("KERNEL_OK")
</pallas_src>

<mosaic_0001>
module attributes {stable_mosaic.version = 11 : i64} {
  func.func @_proj_kernel(%arg0: i32, %arg1: memref<24x32xbf16, #tpu.memory_space<vmem>>, %arg2: memref<32x128xbf16, #tpu.memory_space<vmem>>, %arg3: memref<1x128xf32, #tpu.memory_space<vmem>>, %arg4: memref<24x128xf32, #tpu.memory_space<vmem>>) attributes {dimension_semantics = [#tpu.dimension_semantics<parallel>], iteration_bounds = array<i64: 1>, scalar_prefetch = 0 : i64, scratch_operands = 0 : i64, tpu.core_type = #tpu.core_type<tc>, window_params = [{transform_indices = @transform_0, window_bounds = array<i64: 24, 32>}, {pipeline_mode = #tpu.pipeline_mode<synchronous>, transform_indices = @transform_1, window_bounds = array<i64: 32, 128>}, {pipeline_mode = #tpu.pipeline_mode<synchronous>, transform_indices = @transform_2, window_bounds = array<i64: 1, 128>}, {transform_indices = @transform_3, window_bounds = array<i64: 24, 128>}]} {
    %c0 = arith.constant 0 : index
    %c0_0 = arith.constant 0 : index
    %0 = vector.load %arg1[%c0, %c0_0] : memref<24x32xbf16, #tpu.memory_space<vmem>>, vector<24x32xbf16>
    %c0_1 = arith.constant 0 : index
    %c0_2 = arith.constant 0 : index
    %1 = vector.load %arg2[%c0_1, %c0_2] : memref<32x128xbf16, #tpu.memory_space<vmem>>, vector<32x128xbf16>
    %cst = arith.constant dense<0.000000e+00> : vector<24x128xf32>
    %2 = tpu.matmul %0, %1, %cst {dimension_numbers = #tpu.dot_dimension_numbers<[1], [0], [0], [1], [0, 0, 1, 1], [], []>} : vector<24x32xbf16>, vector<32x128xbf16>, vector<24x128xf32> -> vector<24x128xf32>
    %c0_3 = arith.constant 0 : index
    %c0_4 = arith.constant 0 : index
    %3 = vector.load %arg3[%c0_3, %c0_4] : memref<1x128xf32, #tpu.memory_space<vmem>>, vector<1x128xf32>
    %4 = vector.broadcast %3 : vector<1x128xf32> to vector<24x128xf32>
    %5 = arith.addf %2, %4 : vector<24x128xf32>
    %c0_5 = arith.constant 0 : index
    %c0_6 = arith.constant 0 : index
    %6 = vector.load %arg4[%c0_5, %c0_6] : memref<24x128xf32, #tpu.memory_space<vmem>>, vector<24x128xf32>
    tpu.vector_store %arg4[%c0_5, %c0_6], %5 {strides = array<i32>} : memref<24x128xf32, #tpu.memory_space<vmem>>, vector<24x128xf32>,
    return
  }
  func.func @transform_0(%arg0: i32) -> (i32, i32) {
    %c0_i32 = arith.constant 0 : i32
    %c0_i32_0 = arith.constant 0 : i32
    return %arg0, %c0_i32 : i32, i32
  }
  func.func @transform_1(%arg0: i32) -> (i32, i32) {
    %c0_i32 = arith.constant 0 : i32
    %c0_i32_0 = arith.constant 0 : i32
    %c0_i32_1 = arith.constant 0 : i32
    return %c0_i32, %c0_i32_0 : i32, i32
  }
  func.func @transform_2(%arg0: i32) -> (i32, i32) {
    %c0_i32 = arith.constant 0 : i32
    %c0_i32_0 = arith.constant 0 : i32
    %c0_i32_1 = arith.constant 0 : i32
    return %c0_i32, %c0_i32_0 : i32, i32
  }
  func.func @transform_3(%arg0: i32) -> (i32, i32) {
    %c0_i32 = arith.constant 0 : i32
    %c0_i32_0 = arith.constant 0 : i32
    return %arg0, %c0_i32 : i32, i32
  }
}

</mosaic_0001>

<llo_original>
// kernel: tpu_custom_call.1
$region0: #{tpu_custom_call.1}
  #allocation0 [shape = 'u32[]', space=smem, size = 0x4, offset = 0x4, fixed_abs, tag = 'smem constant byte address 0x4 - core index']
  #allocation1 [shape = 'u32[144,128]{1,0:T(1,128)}', space=vmem, size = 0x12000, scoped, tag = 'internal scratch']
  %s0 = inlined_call_operand.hbm [shape: bf16[24,32], index: 0, kind: input, shape index: {}]
  %s1 = inlined_call_operand.hbm [shape: bf16[32,128], index: 1, kind: input, shape index: {}]
  %s2 = inlined_call_operand.vmem [shape: f32[1,128], index: 2, kind: input, shape index: {}]
  %s3 = inlined_call_operand.hbm [shape: f32[24,128], index: 3, kind: output, shape index: {}]
  %s4 = sld [smem:[#allocation0]]
  $region30: #{tpu_custom_call.1} parent=0
    _
  %s6 = ssub.s32 1, %s4
  %s7 = scalar_select 0, %s6, %s4
  $region1: #{tpu_custom_call.1} parent=0
    #allocation2 [shape = 'u8[6144]{0}', space=vmem, size = 0x1800, scoped, tag = 'input window, operand 0, single buffered']
    #allocation3 [shape = 's32[1]{0}', space=sflag, size = 0x4, scoped, tag = 'scoped memory for tpu_custom_call.1']
    #allocation4 [shape = 's32[1]{0}', space=sflag, size = 0x4, scoped, tag = 'scoped memory for tpu_custom_call.1']
    #allocation5 [shape = 'u8[8192]{0}', space=vmem, size = 0x2000, scoped, tag = 'input window, operand 1, single buffered']
    #allocation6 [shape = 's32[1]{0}', space=sflag, size = 0x4, scoped, tag = 'scoped memory for tpu_custom_call.1']
    #allocation7 [shape = 'u8[12288]{0}', space=vmem, size = 0x3000, scoped, tag = 'output window, operand 0, single buffered']
    %8 = vsyncpa [#allocation3], 0
    %9 = vsyncpa [#allocation6], 0
    %10 = vsyncpa [#allocation4], 0
    // Predicated region
    $region2: #{tpu_custom_call.1} parent=1 // pred_check
      _
    $region3: #{tpu_custom_call.1} parent=1 // pred_check_branch
      %12 = sbr.rel (0) target = $region5
    $region4: #{tpu_custom_call.1} parent=1 // pred_region
      %s14 = ssub.s32 192, 192
      %15 = vsyncadd [#allocation3], %s14
      %s16 = sshll.u32 [#allocation2], 4
      %s17 = int_to_ptr.vmem [resolvable:$true] %s16
      %22 = dma.hbm_to_vmem [thread:$0]  %s0, 192, %s17, [#allocation3], 64, 64, 4
    $region5: #{tpu_custom_call.1} parent=1 // pred_fallthru
      _
    // Predicated region
    $region6: #{tpu_custom_call.1} parent=1 // pred_check
      _
    $region7: #{tpu_custom_call.1} parent=1 // pred_check_branch
      %24 = sbr.rel (0) target = $region9
    $region8: #{tpu_custom_call.1} parent=1 // pred_region
      %s26 = ssub.s32 256, 256
      %27 = vsyncadd [#allocation6], %s26
      %s28 = sshll.u32 [#allocation5], 4
      %s29 = int_to_ptr.vmem [resolvable:$true] %s28
      %34 = dma.hbm_to_vmem [thread:$0]  %s1, 256, %s29, [#allocation6], 64, 64, 4
    $region9: #{tpu_custom_call.1} parent=1 // pred_fallthru
      _
    // Predicated region
    $region10: #{tpu_custom_call.1} parent=1 // pred_check
      _
    $region11: #{tpu_custom_call.1} parent=1 // pred_check_branch
      %36 = sbr.rel (0) target = $region13
    $region12: #{tpu_custom_call.1} parent=1 // pred_region
      _
    $region13: #{tpu_custom_call.1} parent=1 // pred_fallthru
      _
    // Predicated region
    $region14: #{tpu_custom_call.1} parent=1 // pred_check
      _
    $region15: #{tpu_custom_call.1} parent=1 // pred_check_branch
      %38 = sbr.rel (0) target = $region17
    $region16: #{tpu_custom_call.1} parent=1 // pred_region
      %39 = dma.done [#allocation3], 192
    $region17: #{tpu_custom_call.1} parent=1 // pred_fallthru
      _
    // Predicated region
    $region18: #{tpu_custom_call.1} parent=1 // pred_check
      _
    $region19: #{tpu_custom_call.1} parent=1 // pred_check_branch
      %41 = sbr.rel (0) target = $region21
    $region20: #{tpu_custom_call.1} parent=1 // pred_region
      %42 = dma.done [#allocation6], 256
    $region21: #{tpu_custom_call.1} parent=1 // pred_fallthru
      _
    %v44 = vld [vmem:[#allocation2] sm:$0xf]
    %v45 = vld [vmem:[#allocation2 + $0x4] sm:$0xf]
    %v46 = vld [vmem:[#allocation2 + $0x8] sm:$0xf]
    %v47 = vld [vmem:[#allocation5] sm:$0xf]
    %v48 = vld [vmem:[#allocation5 + $0x4] sm:$0xf]
    %v49 = vld [vmem:[#allocation5 + $0x8] sm:$0xf]
    %v50 = vld [vmem:[#allocation5 + $0xc] sm:$0xf]
    %v51 = vld [vmem:[%s2] sm:$0x1]
    %v53 = vlaneseq
    %v54 = vshrl.u32 %v53, 7
    %v55 = vsub.s32 0, %v54
    %v56 = vrot.slane %v51, %v55
    %v61 = vunpack.c.l.b16 %v44
    %v62 = vunpack.c.l.b16 %v45
    %v63 = vunpack.c.l.b16 %v46
    %v64 = vpack.c.b16 %v62, %v61
    %v65 = vpack.c.b16 %v63, %v63
    %v70 = vunpack.c.l.b16 %v47
    %v71 = vunpack.c.l.b16 %v48
    %v72 = vunpack.c.l.b16 %v49
    %v73 = vunpack.c.l.b16 %v50
    %v74 = vpack.c.b16 %v71, %v70
    %v75 = vpack.c.b16 %v73, %v72
    %vm78 = vcmask 261120
    %v80 = vsel %vm78, %v64, 0
    %v83 = vsel %vm78, %v65, 0
    %85 = vmatprep.subr.bf16.mxu0 0
    %86 = vmatpush1.bf16.msra.mxu0 %v74
    %87 = vmatprep.subr.bf16.mxu0 0
    %88 = vmatpush1.bf16.msra.mxu0 %v75
    %89 = vmatprep.subr.bf16.mxu0 0
    %90 = vmatpush1.bf16.msra.mxu0 0
    %91 = vmatprep.subr.bf16.mxu0 0
    %92 = vmatpush1.bf16.msra.mxu0 0
    %93 = vmatprep.subr.bf16.mxu0 0
    %94 = vmatpush1.bf16.msra.mxu0 0
    %95 = vmatprep.subr.bf16.mxu0 0
    %96 = vmatpush1.bf16.msra.mxu0 0
    %97 = vmatprep.subr.bf16.mxu0 0
    %98 = vmatpush1.bf16.msra.mxu0 0
    %99 = vmatprep.subr.bf16.mxu0 0
    %100 = vmatpush1.bf16.msra.mxu0 0
    %101 = vmatprep.subr.bf16.mxu0 0
    %102 = vmatpush1.bf16.msra.mxu0 0
    %103 = vmatprep.subr.bf16.mxu0 0
    %104 = vmatpush1.bf16.msra.mxu0 0
    %105 = vmatprep.subr.bf16.mxu0 0
    %106 = vmatpush1.bf16.msra.mxu0 0
    %107 = vmatprep.subr.bf16.mxu0 0
    %108 = vmatpush1.bf16.msra.mxu0 0
    %109 = vmatprep.subr.bf16.mxu0 0
    %110 = vmatpush1.bf16.msra.mxu0 0
    %111 = vmatprep.subr.bf16.mxu0 0
    %112 = vmatpush1.bf16.msra.mxu0 0
    %113 = vmatprep.subr.bf16.mxu0 0
    %114 = vmatpush1.bf16.msra.mxu0 0
    %115 = vmatprep.subr.bf16.mxu0 0
    %116 = vmatpush1.bf16.msra.mxu0 0
    %117 = vmatprep.mubr.bf16.mxu0 0
    %118 = vmatmul.mubr.bf16.gmra.mrb[0].mxu0 %v80
    %v119 = vpop.f32.mrb[0].mxu0
    %v120 = vadd.f32 %v56, %v119
    %v121 = vpop.f32.mrb[0].mxu0
    %v122 = vpop.f32.mrb[0].mxu0
    %v123 = vadd.f32 %v56, %v122
    %v124 = vpop.f32.mrb[0].mxu0
    %125 = vmatprep.mubr.bf16.mxu0 0
    %126 = vmatmul.mubr.bf16.gmra.mrb[0].mxu0 %v83
    %v127 = vpop.f32.mrb[0].mxu0
    %v128 = vadd.f32 %v56, %v127
    %v129 = vpop.f32.mrb[0].mxu0
    %v130 = vpop.f32.mrb[0].mxu0
    %v131 = vpop.f32.mrb[0].mxu0
    %132 = vdwg.mxu0
    %133 = vst [vmem:[#allocation7] sm:$0xff] %v120
    %134 = vst [vmem:[#allocation7 + $0x8] sm:$0xff] %v123
    %135 = vst [vmem:[#allocation7 + $0x10] sm:$0xff] %v128
    // Predicated region
    $region22: #{tpu_custom_call.1} parent=1 // pred_check
      _
    $region23: #{tpu_custom_call.1} parent=1 // pred_check_branch
      %137 = sbr.rel (0) target = $region25
    $region24: #{tpu_custom_call.1} parent=1 // pred_region
      %s139 = ssub.s32 384, 384
      %140 = vsyncadd [#allocation4], %s139
      %s141 = sshll.u32 [#allocation7], 4
      %s142 = int_to_ptr.vmem [resolvable:$true] %s141
      %147 = dma.vmem_to_hbm [thread:$0]  %s142, 384, %s3, [#allocation4], 128, 128, 8
    $region25: #{tpu_custom_call.1} parent=1 // pred_fallthru
      _
    // Predicated region
    $region26: #{tpu_custom_call.1} parent=1 // pred_check
      _
    $region27: #{tpu_custom_call.1} parent=1 // pred_check_branch
      %149 = sbr.rel (0) target = $region29
    $region28: #{tpu_custom_call.1} parent=1 // pred_region
      %150 = dma.done [#allocation4], 384
    $region29: #{tpu_custom_call.1} parent=1 // pred_fallthru
      _
    %151 = vsyncpa [#allocation3], 1
    %152 = vsyncpa [#allocation6], 1
    %153 = vsyncpa [#allocation4], 1

</llo_original>
